<compile_context>
chip_gen: v7x
topology: tpu7x:2x2x1
jax: 0.10.0
libtpu: 0.0.40
codegen_flags: <defaults>
</compile_context>

<pallas_src>
import functools

import jax
import jax.numpy as jnp
from jax.experimental import pallas as pl
from jax.experimental.pallas import tpu as pltpu


def _softmax_last(x):
    m = jnp.max(x, axis=-1, keepdims=True)
    e = jnp.exp(x - m)
    return e / jnp.sum(e, axis=-1, keepdims=True)


# ----------------------------- kernel 1: front -------------------------------
def _front_kernel(x_ref, pos_ref, g_ref, b_ref, wqk_ref, bqk_ref, wv_ref, bv_ref,
                  xe_ref, xn_ref, qk_ref, v_ref, *, eps):
    x = x_ref[0]                                      # (N, C) tokens of batch b
    xe = x + pos_ref[...]                             # + positional embedding
    mu = jnp.mean(xe, axis=-1, keepdims=True)         # LayerNorm over C
    var = jnp.mean(jnp.square(xe - mu), axis=-1, keepdims=True)
    xn = (xe - mu) * jax.lax.rsqrt(var + eps)
    xn = xn * g_ref[...] + b_ref[...]
    qk = jnp.dot(xn, wqk_ref[...], preferred_element_type=jnp.float32) + bqk_ref[...]
    v = jnp.dot(xn, wv_ref[...], preferred_element_type=jnp.float32) + bv_ref[...]
    xe_ref[0] = xe
    xn_ref[0] = xn
    qk_ref[0] = qk
    v_ref[0] = v


# ------------------------- kernel 2: DCA attention ----------------------------
def _dca_attn_kernel(q_ref, k_ref, v_ref, t_ref, wks_ref, bks_ref, wvs_ref, bvs_ref,
                     oc_ref, os_ref):
    # One (batch, head) pair per grid step.  q/k/v blocks: (N, hd).
    q = q_ref[0]
    k = k_ref[0]
    v = v_ref[0]
    t = t_ref[pl.program_id(0)]                       # per-head temperature (SMEM)

    # Channel attention: (hd, hd) logits contracted over the sequence dim.
    s_ch = jnp.dot(q.T, k, preferred_element_type=jnp.float32) * t
    a_ch = _softmax_last(s_ch)
    # (attn_channel @ v^T)^T  ==  v @ attn_channel^T   -> (N, hd)
    oc = jnp.dot(v, a_ch.T, preferred_element_type=jnp.float32)

    # Spatial attention: project K/V along the sequence dim down to `proj` size.
    k_sp = jnp.dot(k.T, wks_ref[...], preferred_element_type=jnp.float32) + bks_ref[...]
    v_sp = jnp.dot(v.T, wvs_ref[...], preferred_element_type=jnp.float32) + bvs_ref[...]
    s_sp = jnp.dot(q, k_sp, preferred_element_type=jnp.float32) * t      # (N, proj)
    a_sp = _softmax_last(s_sp)
    osp = jnp.dot(a_sp, v_sp.T, preferred_element_type=jnp.float32)      # (N, hd)

    # TODO(synk): attention dropout (attn_drop) omitted — inference/eval semantics.
    oc_ref[0] = oc
    os_ref[0] = osp


# ------------------------------ kernel 3: tail --------------------------------
def _tail_kernel(oc_ref, os_ref, xn_ref, xe_ref, x_ref,
                 wpa_ref, wpb_ref, bpo_ref, wf1_ref, bf1_ref, wf2_ref, bf2_ref,
                 o_ref):
    xn = xn_ref[0]
    oc = oc_ref[0] + xn                               # channel branch + residual
    osp = os_ref[0] + xn                              # spatial branch + residual
    # proj_out(concat(oc, osp)) == oc @ Wpo[:C] + osp @ Wpo[C:] + b
    dca = (jnp.dot(oc, wpa_ref[...], preferred_element_type=jnp.float32)
           + jnp.dot(osp, wpb_ref[...], preferred_element_type=jnp.float32)
           + bpo_ref[...])
    attn = xe_ref[0] + dca                            # token residual
    h = jnp.dot(attn, wf1_ref[...], preferred_element_type=jnp.float32) + bf1_ref[...]
    h = jnp.maximum(h, 0.0)                           # 1x1 conv -> ReLU -> 1x1 conv
    ffn = jnp.dot(h, wf2_ref[...], preferred_element_type=jnp.float32) + bf2_ref[...]
    o_ref[0] = ffn + attn + x_ref[0]                  # + ffn residual, + input y


# -------------------------------- wrapper -------------------------------------
def dcat_forward(x, params, *, num_heads, eps=1e-5):
    B, C, H, W = x.shape
    N = H * W
    hd = C // num_heads
    P = params["w_ks"].shape[1]
    BH = B * num_heads
    parallel = pltpu.CompilerParams(dimension_semantics=("parallel",))

    # NCHW -> token layout (free XLA glue).
    x_tok = jnp.transpose(x.reshape(B, C, N), (0, 2, 1))          # (B, N, C)

    perb = pl.BlockSpec((1, N, C), lambda b: (b, 0, 0))
    full2 = lambda s: pl.BlockSpec(s, lambda b: (0, 0))

    # ---- pass 1: pos-embed + LayerNorm + QK / V projections (grid over B) ----
    xe, xn, qk, v = pl.pallas_call(
        functools.partial(_front_kernel, eps=eps),
        out_shape=(
            jax.ShapeDtypeStruct((B, N, C), jnp.float32),          # xe
            jax.ShapeDtypeStruct((B, N, C), jnp.float32),          # xn
            jax.ShapeDtypeStruct((B, N, 2 * C), jnp.float32),      # qk
            jax.ShapeDtypeStruct((B, N, C), jnp.float32),          # v
        ),
        grid=(B,),
        in_specs=[
            perb,                                                  # x_tok
            full2((N, C)),                                         # pos embed
            full2((1, C)), full2((1, C)),                          # gamma, beta
            full2((C, 2 * C)), full2((1, 2 * C)),                  # w_qk, b_qk
            full2((C, C)), full2((1, C)),                          # w_v, b_v
        ],
        out_specs=(
            perb, perb,
            pl.BlockSpec((1, N, 2 * C), lambda b: (b, 0, 0)),
            perb,
        ),
        compiler_params=parallel,
    )(x_tok, params["pos"], params["gamma"], params["beta"],
      params["w_qk"], params["b_qk"], params["w_v"], params["b_v"])

    # ---- head split exactly as the module does it (free XLA glue) ----
    q = qk[..., :C].reshape(B, N, num_heads, hd).transpose(0, 2, 1, 3).reshape(BH, N, hd)
    k = qk[..., C:].reshape(B, N, num_heads, hd).transpose(0, 2, 1, 3).reshape(BH, N, hd)
    vh = v.reshape(B, N, num_heads, hd).transpose(0, 2, 1, 3).reshape(BH, N, hd)
    temp_bh = jnp.tile(params["temperature"].reshape(num_heads), (B,))  # (B*nh,)

    # ---- pass 2: per-(batch, head) channel + spatial attention ----
    perbh = pl.BlockSpec((1, N, hd), lambda i: (i, 0, 0))
    oc_bh, os_bh = pl.pallas_call(
        _dca_attn_kernel,
        out_shape=(jax.ShapeDtypeStruct((BH, N, hd), jnp.float32),
                   jax.ShapeDtypeStruct((BH, N, hd), jnp.float32)),
        grid=(BH,),
        in_specs=[
            perbh, perbh, perbh,                                   # q, k, v
            pl.BlockSpec(memory_space=pltpu.MemorySpace.SMEM),     # temperature
            pl.BlockSpec((N, P), lambda i: (0, 0)),                # w_k_spatial
            pl.BlockSpec((1, P), lambda i: (0, 0)),                # b_k_spatial
            pl.BlockSpec((N, P), lambda i: (0, 0)),                # w_v_spatial
            pl.BlockSpec((1, P), lambda i: (0, 0)),                # b_v_spatial
        ],
        out_specs=(perbh, perbh),
        compiler_params=parallel,
    )(q, k, vh, temp_bh,
      params["w_ks"], params["b_ks"], params["w_vs"], params["b_vs"])

    # The module's (non-standard) head-merge reshapes, as free XLA glue.
    out_ch = oc_bh.reshape(B, num_heads, N, hd).reshape(B, N, C)
    out_sp = jnp.transpose(os_bh.reshape(B, num_heads, N, hd), (0, 3, 1, 2)).reshape(B, N, C)

    w_po_a = params["w_po"][:C]
    w_po_b = params["w_po"][C:]

    # ---- pass 3: residuals + proj_out + 1x1-conv FFN + residuals (grid over B) ----
    out_tok = pl.pallas_call(
        _tail_kernel,
        out_shape=jax.ShapeDtypeStruct((B, N, C), jnp.float32),
        grid=(B,),
        in_specs=[
            perb, perb, perb, perb, perb,                          # out_ch, out_sp, xn, xe, x_tok
            full2((C, C)), full2((C, C)), full2((1, C)),           # w_po halves, b_po
            full2((C, C)), full2((1, C)),                          # ffn conv1, bias1
            full2((C, C)), full2((1, C)),                          # ffn conv2, bias2
        ],
        out_specs=perb,
        compiler_params=parallel,
    )(out_ch, out_sp, xn, xe, x_tok, w_po_a, w_po_b, params["b_po"],
      params["w_f1"], params["b_f1"], params["w_f2"], params["b_f2"])

    # Token layout -> NCHW (the +y residual was already added in the tail kernel).
    return jnp.transpose(out_tok, (0, 2, 1)).reshape(B, C, H, W)


# -------------------------- pure-JAX reference --------------------------------
def dcat_reference(x, p, *, num_heads, eps=1e-5):
    """Mirrors the PyTorch DCAT.forward op-for-op (eval mode, dropout = identity)."""
    B, C, H, W = x.shape
    N = H * W
    hd = C // num_heads
    y = x
    xt = jnp.transpose(x.reshape(B, C, N), (0, 2, 1)) + p["pos"][None]
    mu = jnp.mean(xt, axis=-1, keepdims=True)
    var = jnp.mean(jnp.square(xt - mu), axis=-1, keepdims=True)
    xn = (xt - mu) / jnp.sqrt(var + eps) * p["gamma"] + p["beta"]
    qk = (xn @ p["w_qk"] + p["b_qk"]).reshape(B, N, 2, num_heads, hd).transpose(2, 0, 3, 1, 4)
    q, k = qk[0], qk[1]                                   # (B, nh, N, hd)
    v = (xn @ p["w_v"] + p["b_v"]).reshape(B, N, num_heads, hd).transpose(0, 2, 1, 3)
    q = jnp.swapaxes(q, -2, -1)                           # (B, nh, hd, N)
    v = jnp.swapaxes(v, -2, -1)                           # (B, nh, hd, N)
    temp = p["temperature"].reshape(num_heads, 1, 1)
    attn_ch = jax.nn.softmax((q @ k) * temp, axis=-1)     # (B, nh, hd, hd)
    out_ch = jnp.swapaxes(attn_ch @ v, -2, -1).reshape(B, N, C) + xn
    kT = jnp.swapaxes(k, -2, -1)                          # (B, nh, hd, N)
    k_sp = kT @ p["w_ks"] + p["b_ks"]                     # (B, nh, hd, P)
    v_sp = v @ p["w_vs"] + p["b_vs"]                      # (B, nh, hd, P)
    attn_sp = jax.nn.softmax((jnp.swapaxes(q, -2, -1) @ k_sp) * temp, axis=-1)
    out_sp = attn_sp @ jnp.swapaxes(v_sp, -2, -1)         # (B, nh, N, hd)
    out_sp = jnp.transpose(out_sp, (0, 3, 1, 2)).reshape(B, N, C) + xn
    dca = jnp.concatenate([out_ch, out_sp], axis=-1) @ p["w_po"] + p["b_po"]
    attn = xt + dca
    h = jnp.maximum(attn @ p["w_f1"] + p["b_f1"], 0.0)
    ffn = h @ p["w_f2"] + p["b_f2"]
    out_tok = ffn + attn
    return jnp.transpose(out_tok, (0, 2, 1)).reshape(B, C, H, W) + y


if __name__ == "__main__":
    # Small shapes consistent with DCAT(input_size=H*W, hidden_size=C, proj_size, num_heads).
    B, C, H, W = 2, 64, 8, 8
    num_heads = 8
    N = H * W          # input_size = 64
    P = 32             # proj_size
    s = 0.1

    keys = jax.random.split(jax.random.PRNGKey(0), 18)
    params = dict(
        pos=0.02 * jax.random.normal(keys[0], (N, C), jnp.float32),
        gamma=1.0 + 0.05 * jax.random.normal(keys[1], (1, C), jnp.float32),
        beta=0.05 * jax.random.normal(keys[2], (1, C), jnp.float32),
        temperature=1.0 + 0.1 * jax.random.normal(keys[3], (num_heads,), jnp.float32),
        w_qk=s * jax.random.normal(keys[4], (C, 2 * C), jnp.float32),
        b_qk=s * jax.random.normal(keys[5], (1, 2 * C), jnp.float32),
        w_v=s * jax.random.normal(keys[6], (C, C), jnp.float32),
        b_v=s * jax.random.normal(keys[7], (1, C), jnp.float32),
        w_ks=s * jax.random.normal(keys[8], (N, P), jnp.float32),
        b_ks=s * jax.random.normal(keys[9], (1, P), jnp.float32),
        w_vs=s * jax.random.normal(keys[10], (N, P), jnp.float32),
        b_vs=s * jax.random.normal(keys[11], (1, P), jnp.float32),
        w_po=s * jax.random.normal(keys[12], (2 * C, C), jnp.float32),
        b_po=s * jax.random.normal(keys[13], (1, C), jnp.float32),
        w_f1=s * jax.random.normal(keys[14], (C, C), jnp.float32),
        b_f1=s * jax.random.normal(keys[15], (1, C), jnp.float32),
        w_f2=s * jax.random.normal(keys[16], (C, C), jnp.float32),
        b_f2=jnp.zeros((1, C), jnp.float32),
    )
    x = jax.random.normal(keys[17], (B, C, H, W), jnp.float32)

    out = dcat_forward(x, params, num_heads=num_heads)
    jax.block_until_ready(out)

    ref = dcat_reference(x, params, num_heads=num_heads)
    assert out.shape == (B, C, H, W)
    assert jnp.allclose(out, ref, atol=2e-4, rtol=2e-4), float(jnp.max(jnp.abs(out - ref)))

    print("KERNEL_OK")
</pallas_src>

<mosaic_0001>
module attributes {stable_mosaic.version = 11 : i64} {
  func.func @_front_kernel(%arg0: i32, %arg1: memref<1x64x64xf32, #tpu.memory_space<vmem>>, %arg2: memref<64x64xf32, #tpu.memory_space<vmem>>, %arg3: memref<1x64xf32, #tpu.memory_space<vmem>>, %arg4: memref<1x64xf32, #tpu.memory_space<vmem>>, %arg5: memref<64x128xf32, #tpu.memory_space<vmem>>, %arg6: memref<1x128xf32, #tpu.memory_space<vmem>>, %arg7: memref<64x64xf32, #tpu.memory_space<vmem>>, %arg8: memref<1x64xf32, #tpu.memory_space<vmem>>, %arg9: memref<1x64x64xf32, #tpu.memory_space<vmem>>, %arg10: memref<1x64x64xf32, #tpu.memory_space<vmem>>, %arg11: memref<1x64x128xf32, #tpu.memory_space<vmem>>, %arg12: memref<1x64x64xf32, #tpu.memory_space<vmem>>) attributes {dimension_semantics = [#tpu.dimension_semantics<parallel>], iteration_bounds = array<i64: 2>, scalar_prefetch = 0 : i64, scratch_operands = 0 : i64, tpu.core_type = #tpu.core_type<tc>, window_params = [{transform_indices = @transform_0, window_bounds = array<i64: 1, 64, 64>}, {pipeline_mode = #tpu.pipeline_mode<synchronous>, transform_indices = @transform_1, window_bounds = array<i64: 64, 64>}, {pipeline_mode = #tpu.pipeline_mode<synchronous>, transform_indices = @transform_2, window_bounds = array<i64: 1, 64>}, {pipeline_mode = #tpu.pipeline_mode<synchronous>, transform_indices = @transform_3, window_bounds = array<i64: 1, 64>}, {pipeline_mode = #tpu.pipeline_mode<synchronous>, transform_indices = @transform_4, window_bounds = array<i64: 64, 128>}, {pipeline_mode = #tpu.pipeline_mode<synchronous>, transform_indices = @transform_5, window_bounds = array<i64: 1, 128>}, {pipeline_mode = #tpu.pipeline_mode<synchronous>, transform_indices = @transform_6, window_bounds = array<i64: 64, 64>}, {pipeline_mode = #tpu.pipeline_mode<synchronous>, transform_indices = @transform_7, window_bounds = array<i64: 1, 64>}, {transform_indices = @transform_8, window_bounds = array<i64: 1, 64, 64>}, {transform_indices = @transform_9, window_bounds = array<i64: 1, 64, 64>}, {transform_indices = @transform_10, window_bounds = array<i64: 1, 64, 128>}, {transform_indices = @transform_11, window_bounds = array<i64: 1, 64, 64>}]} {
    %c0 = arith.constant 0 : index
    %c0_0 = arith.constant 0 : index
    %c0_1 = arith.constant 0 : index
    %0 = vector.load %arg1[%c0, %c0_0, %c0_1] : memref<1x64x64xf32, #tpu.memory_space<vmem>>, vector<1x64x64xf32>
    %1 = vector.shape_cast %0 : vector<1x64x64xf32> to vector<64x64xf32>
    %c0_2 = arith.constant 0 : index
    %c0_3 = arith.constant 0 : index
    %2 = vector.load %arg2[%c0_2, %c0_3] : memref<64x64xf32, #tpu.memory_space<vmem>>, vector<64x64xf32>
    %3 = arith.addf %1, %2 : vector<64x64xf32>
    %cst = arith.constant dense<0.000000e+00> : vector<64xf32>
    %4 = vector.multi_reduction <add>, %3, %cst [1] : vector<64x64xf32> to vector<64xf32>
    %5 = vector.shape_cast %4 : vector<64xf32> to vector<64x1xf32>
    %cst_4 = arith.constant 6.400000e+01 : f32
    %6 = vector.broadcast %cst_4 : f32 to vector<64x1xf32>
    %7 = arith.divf %5, %6 : vector<64x1xf32>
    %8 = vector.broadcast %7 : vector<64x1xf32> to vector<64x64xf32>
    %9 = arith.subf %3, %8 : vector<64x64xf32>
    %10 = arith.mulf %9, %9 : vector<64x64xf32>
    %cst_5 = arith.constant dense<0.000000e+00> : vector<64xf32>
    %11 = vector.multi_reduction <add>, %10, %cst_5 [1] : vector<64x64xf32> to vector<64xf32>
    %12 = vector.shape_cast %11 : vector<64xf32> to vector<64x1xf32>
    %cst_6 = arith.constant 6.400000e+01 : f32
    %13 = vector.broadcast %cst_6 : f32 to vector<64x1xf32>
    %14 = arith.divf %12, %13 : vector<64x1xf32>
    %15 = vector.broadcast %7 : vector<64x1xf32> to vector<64x64xf32>
    %16 = arith.subf %3, %15 : vector<64x64xf32>
    %cst_7 = arith.constant 9.99999974E-6 : f32
    %17 = vector.broadcast %cst_7 : f32 to vector<64x1xf32>
    %18 = arith.addf %14, %17 : vector<64x1xf32>
    %19 = math.rsqrt %18 : vector<64x1xf32>
    %20 = vector.broadcast %19 : vector<64x1xf32> to vector<64x64xf32>
    %21 = arith.mulf %16, %20 : vector<64x64xf32>
    %c0_8 = arith.constant 0 : index
    %c0_9 = arith.constant 0 : index
    %22 = vector.load %arg3[%c0_8, %c0_9] : memref<1x64xf32, #tpu.memory_space<vmem>>, vector<1x64xf32>
    %23 = vector.broadcast %22 : vector<1x64xf32> to vector<64x64xf32>
    %24 = arith.mulf %21, %23 : vector<64x64xf32>
    %c0_10 = arith.constant 0 : index
    %c0_11 = arith.constant 0 : index
    %25 = vector.load %arg4[%c0_10, %c0_11] : memref<1x64xf32, #tpu.memory_space<vmem>>, vector<1x64xf32>
    %26 = vector.broadcast %25 : vector<1x64xf32> to vector<64x64xf32>
    %27 = arith.addf %24, %26 : vector<64x64xf32>
    %c0_12 = arith.constant 0 : index
    %c0_13 = arith.constant 0 : index
    %28 = vector.load %arg5[%c0_12, %c0_13] : memref<64x128xf32, #tpu.memory_space<vmem>>, vector<64x128xf32>
    %cst_14 = arith.constant dense<0.000000e+00> : vector<64x128xf32>
    %29 = tpu.matmul %27, %28, %cst_14 {dimension_numbers = #tpu.dot_dimension_numbers<[1], [0], [0], [1], [0, 0, 1, 1], [], []>} : vector<64x64xf32>, vector<64x128xf32>, vector<64x128xf32> -> vector<64x128xf32>
    %c0_15 = arith.constant 0 : index
    %c0_16 = arith.constant 0 : index
    %30 = vector.load %arg6[%c0_15, %c0_16] : memref<1x128xf32, #tpu.memory_space<vmem>>, vector<1x128xf32>
    %31 = vector.broadcast %30 : vector<1x128xf32> to vector<64x128xf32>
    %32 = arith.addf %29, %31 : vector<64x128xf32>
    %c0_17 = arith.constant 0 : index
    %c0_18 = arith.constant 0 : index
    %33 = vector.load %arg7[%c0_17, %c0_18] : memref<64x64xf32, #tpu.memory_space<vmem>>, vector<64x64xf32>
    %cst_19 = arith.constant dense<0.000000e+00> : vector<64x64xf32>
    %34 = tpu.matmul %27, %33, %cst_19 {dimension_numbers = #tpu.dot_dimension_numbers<[1], [0], [0], [1], [0, 0, 1, 1], [], []>} : vector<64x64xf32>, vector<64x64xf32>, vector<64x64xf32> -> vector<64x64xf32>
    %c0_20 = arith.constant 0 : index
    %c0_21 = arith.constant 0 : index
    %35 = vector.load %arg8[%c0_20, %c0_21] : memref<1x64xf32, #tpu.memory_space<vmem>>, vector<1x64xf32>
    %36 = vector.broadcast %35 : vector<1x64xf32> to vector<64x64xf32>
    %37 = arith.addf %34, %36 : vector<64x64xf32>
    %c0_22 = arith.constant 0 : index
    %c0_23 = arith.constant 0 : index
    %c0_24 = arith.constant 0 : index
    %38 = vector.load %arg9[%c0_22, %c0_23, %c0_24] : memref<1x64x64xf32, #tpu.memory_space<vmem>>, vector<1x64x64xf32>
    %39 = vector.shape_cast %38 : vector<1x64x64xf32> to vector<64x64xf32>
    %40 = vector.shape_cast %3 : vector<64x64xf32> to vector<1x64x64xf32>
    tpu.vector_store %arg9[%c0_22, %c0_23, %c0_24], %40 {strides = array<i32>} : memref<1x64x64xf32, #tpu.memory_space<vmem>>, vector<1x64x64xf32>,
    %c0_25 = arith.constant 0 : index
    %c0_26 = arith.constant 0 : index
    %c0_27 = arith.constant 0 : index
    %41 = vector.load %arg10[%c0_25, %c0_26, %c0_27] : memref<1x64x64xf32, #tpu.memory_space<vmem>>, vector<1x64x64xf32>
    %42 = vector.shape_cast %41 : vector<1x64x64xf32> to vector<64x64xf32>
    %43 = vector.shape_cast %27 : vector<64x64xf32> to vector<1x64x64xf32>
    tpu.vector_store %arg10[%c0_25, %c0_26, %c0_27], %43 {strides = array<i32>} : memref<1x64x64xf32, #tpu.memory_space<vmem>>, vector<1x64x64xf32>,
    %c0_28 = arith.constant 0 : index
    %c0_29 = arith.constant 0 : index
    %c0_30 = arith.constant 0 : index
    %44 = vector.load %arg11[%c0_28, %c0_29, %c0_30] : memref<1x64x128xf32, #tpu.memory_space<vmem>>, vector<1x64x128xf32>
    %45 = vector.shape_cast %44 : vector<1x64x128xf32> to vector<64x128xf32>
    %46 = vector.shape_cast %32 : vector<64x128xf32> to vector<1x64x128xf32>
    tpu.vector_store %arg11[%c0_28, %c0_29, %c0_30], %46 {strides = array<i32>} : memref<1x64x128xf32, #tpu.memory_space<vmem>>, vector<1x64x128xf32>,
    %c0_31 = arith.constant 0 : index
    %c0_32 = arith.constant 0 : index
    %c0_33 = arith.constant 0 : index
    %47 = vector.load %arg12[%c0_31, %c0_32, %c0_33] : memref<1x64x64xf32, #tpu.memory_space<vmem>>, vector<1x64x64xf32>
    %48 = vector.shape_cast %47 : vector<1x64x64xf32> to vector<64x64xf32>
    %49 = vector.shape_cast %37 : vector<64x64xf32> to vector<1x64x64xf32>
    tpu.vector_store %arg12[%c0_31, %c0_32, %c0_33], %49 {strides = array<i32>} : memref<1x64x64xf32, #tpu.memory_space<vmem>>, vector<1x64x64xf32>,
    return
  }
  func.func @transform_0(%arg0: i32) -> (i32, i32, i32) {
    %c0_i32 = arith.constant 0 : i32
    %c0_i32_0 = arith.constant 0 : i32
    %c0_i32_1 = arith.constant 0 : i32
    return %arg0, %c0_i32, %c0_i32_0 : i32, i32, i32
  }
  func.func @transform_1(%arg0: i32) -> (i32, i32) {
    %c0_i32 = arith.constant 0 : i32
    %c0_i32_0 = arith.constant 0 : i32
    %c0_i32_1 = arith.constant 0 : i32
    return %c0_i32, %c0_i32_0 : i32, i32
  }
  func.func @transform_2(%arg0: i32) -> (i32, i32) {
    %c0_i32 = arith.constant 0 : i32
    %c0_i32_0 = arith.constant 0 : i32
    %c0_i32_1 = arith.constant 0 : i32
    return %c0_i32, %c0_i32_0 : i32, i32
  }
  func.func @transform_3(%arg0: i32) -> (i32, i32) {
    %c0_i32 = arith.constant 0 : i32
    %c0_i32_0 = arith.constant 0 : i32
    %c0_i32_1 = arith.constant 0 : i32
    return %c0_i32, %c0_i32_0 : i32, i32
  }
  func.func @transform_4(%arg0: i32) -> (i32, i32) {
    %c0_i32 = arith.constant 0 : i32
    %c0_i32_0 = arith.constant 0 : i32
    %c0_i32_1 = arith.constant 0 : i32
    return %c0_i32, %c0_i32_0 : i32, i32
  }
  func.func @transform_5(%arg0: i32) -> (i32, i32) {
    %c0_i32 = arith.constant 0 : i32
    %c0_i32_0 = arith.constant 0 : i32
    %c0_i32_1 = arith.constant 0 : i32
    return %c0_i32, %c0_i32_0 : i32, i32
  }
  func.func @transform_6(%arg0: i32) -> (i32, i32) {
    %c0_i32 = arith.constant 0 : i32
    %c0_i32_0 = arith.constant 0 : i32
    %c0_i32_1 = arith.constant 0 : i32
    return %c0_i32, %c0_i32_0 : i32, i32
  }
  func.func @transform_7(%arg0: i32) -> (i32, i32) {
    %c0_i32 = arith.constant 0 : i32
    %c0_i32_0 = arith.constant 0 : i32
    %c0_i32_1 = arith.constant 0 : i32
    return %c0_i32, %c0_i32_0 : i32, i32
  }
  func.func @transform_8(%arg0: i32) -> (i32, i32, i32) {
    %c0_i32 = arith.constant 0 : i32
    %c0_i32_0 = arith.constant 0 : i32
    %c0_i32_1 = arith.constant 0 : i32
    return %arg0, %c0_i32, %c0_i32_0 : i32, i32, i32
  }
  func.func @transform_9(%arg0: i32) -> (i32, i32, i32) {
    %c0_i32 = arith.constant 0 : i32
    %c0_i32_0 = arith.constant 0 : i32
    %c0_i32_1 = arith.constant 0 : i32
    return %arg0, %c0_i32, %c0_i32_0 : i32, i32, i32
  }
  func.func @transform_10(%arg0: i32) -> (i32, i32, i32) {
    %c0_i32 = arith.constant 0 : i32
    %c0_i32_0 = arith.constant 0 : i32
    %c0_i32_1 = arith.constant 0 : i32
    return %arg0, %c0_i32, %c0_i32_0 : i32, i32, i32
  }
  func.func @transform_11(%arg0: i32) -> (i32, i32, i32) {
    %c0_i32 = arith.constant 0 : i32
    %c0_i32_0 = arith.constant 0 : i32
    %c0_i32_1 = arith.constant 0 : i32
    return %arg0, %c0_i32, %c0_i32_0 : i32, i32, i32
  }
}

</mosaic_0001>

<llo_original>
// kernel: tpu_custom_call.1
$region0: #{tpu_custom_call.1}
  #allocation0 [shape = 'u32[]', space=smem, size = 0x4, offset = 0x4, fixed_abs, tag = 'smem constant byte address 0x4 - core index']
  #allocation1 [shape = 'u32[144,128]{1,0:T(1,128)}', space=vmem, size = 0x12000, scoped, tag = 'internal scratch']
  %s0 = inlined_call_operand.hbm [shape: f32[2,64,64], index: 0, kind: input, shape index: {}]
  %s1 = inlined_call_operand.hbm [shape: f32[64,64], index: 1, kind: input, shape index: {}]
  %s2 = inlined_call_operand.vmem [shape: f32[1,64], index: 2, kind: input, shape index: {}]
  %s3 = inlined_call_operand.vmem [shape: f32[1,64], index: 3, kind: input, shape index: {}]
  %s4 = inlined_call_operand.hbm [shape: f32[64,128], index: 4, kind: input, shape index: {}]
  %s5 = inlined_call_operand.vmem [shape: f32[1,128], index: 5, kind: input, shape index: {}]
  %s6 = inlined_call_operand.hbm [shape: f32[64,64], index: 6, kind: input, shape index: {}]
  %s7 = inlined_call_operand.vmem [shape: f32[1,64], index: 7, kind: input, shape index: {}]
  %s8 = inlined_call_operand.hbm [shape: f32[2,64,64], index: 8, kind: output, shape index: {0}]
  %s9 = inlined_call_operand.hbm [shape: f32[2,64,64], index: 9, kind: output, shape index: {1}]
  %s10 = inlined_call_operand.hbm [shape: f32[2,64,128], index: 10, kind: output, shape index: {2}]
  %s11 = inlined_call_operand.hbm [shape: f32[2,64,64], index: 11, kind: output, shape index: {3}]
  %12 = xla_tuple %s8, %s9, %s10, %s11
  %s13 = sld [smem:[#allocation0]]
  $region105: #{tpu_custom_call.1} parent=0
    _
  %s15 = ssub.s32 1, %s13
  %s16 = scalar_select 0, %s15, %s13
  $region1: #{tpu_custom_call.1} parent=0
    #allocation2 [shape = 'u8[65536]{0}', space=vmem, size = 0x10000, scoped, tag = 'input window, operand 0']
    #allocation3 [shape = 's32[2]{0}', space=sflag, size = 0x8, scoped, tag = 'scoped memory for tpu_custom_call.1']
    #allocation4 [shape = 's32[2]{0}', space=sflag, size = 0x8, scoped, tag = 'scoped memory for tpu_custom_call.1']
    #allocation5 [shape = 'u8[32768]{0}', space=vmem, size = 0x8000, scoped, tag = 'input window, operand 1, single buffered']
    #allocation6 [shape = 's32[1]{0}', space=sflag, size = 0x4, scoped, tag = 'scoped memory for tpu_custom_call.1']
    #allocation7 [shape = 'u8[32768]{0}', space=vmem, size = 0x8000, scoped, tag = 'input window, operand 4, single buffered']
    #allocation8 [shape = 'u8[32768]{0}', space=vmem, size = 0x8000, scoped, tag = 'input window, operand 6, single buffered']
    #allocation9 [shape = 's32[1]{0}', space=sflag, size = 0x4, scoped, tag = 'scoped memory for tpu_custom_call.1']
    #allocation10 [shape = 'u8[65536]{0}', space=vmem, size = 0x10000, scoped, tag = 'output window, operand 0']
    #allocation11 [shape = 'u8[65536]{0}', space=vmem, size = 0x10000, scoped, tag = 'output window, operand 1']
    #allocation12 [shape = 's32[2]{0}', space=sflag, size = 0x8, scoped, tag = 'scoped memory for tpu_custom_call.1']
    #allocation13 [shape = 'u8[65536]{0}', space=vmem, size = 0x10000, scoped, tag = 'output window, operand 2']
    #allocation14 [shape = 'u8[65536]{0}', space=vmem, size = 0x10000, scoped, tag = 'output window, operand 3']
    #allocation15 [shape = 's32[2]{0}', space=sflag, size = 0x8, scoped, tag = 'scoped memory for tpu_custom_call.1']
    %17 = vsyncpa [#allocation3], 0
    %s18 = scalar_lea.sflag [#allocation3], 1
    %19 = vsyncpa %s18, 0
    %20 = vsyncpa [#allocation6], 0
    %21 = vsyncpa [#allocation9], 0
    %22 = vsyncpa [#allocation4], 0
    %s23 = scalar_lea.sflag [#allocation4], 1
    %24 = vsyncpa %s23, 0
    %25 = vsyncpa [#allocation12], 0
    %s26 = scalar_lea.sflag [#allocation12], 1
    %27 = vsyncpa %s26, 0
    %28 = vsyncpa [#allocation15], 0
    %s29 = scalar_lea.sflag [#allocation15], 1
    %30 = vsyncpa %s29, 0
    loop: start=0, step=1, limit=4
    $region2: #{tpu_custom_call.1} parent=1 // loop_pre_header
      _
    $region3: #{tpu_custom_call.1} parent=1 // loop_header
      %s32 = sphi 0, %s36
      %p33 = scmp.ge.s32.totalorder %s32, 4
      %s42 = sphi 0, %s44
      %s45 = sphi 0, %s42
      %s46 = sphi 0, %s45
      %s62 = sphi 0, %s46
      %s66 = sphi 0, %s66
      %s68 = sphi 0, %s66
      %s69 = sphi 0, %s68
      %s83 = sphi 0, %s69
      %s87 = sphi 0, %s87
      %s89 = sphi 0, %s87
      %s90 = sphi 0, %s89
      %s104 = sphi 0, %s90
      %s108 = sphi 0, %s108
      %s110 = sphi 0, %s108
      %s111 = sphi 0, %s110
      %s125 = sphi 0, %s111
      %s129 = sphi 0, %s129
      %s131 = sphi 0, %s129
      %s132 = sphi 0, %s131
      %s146 = sphi 0, %s132
      %s150 = sphi 0, %s150
      %s152 = sphi 0, %s150
      %s153 = sphi 0, %s152
      %s167 = sphi 0, %s153
      %s171 = sphi 0, %s171
      %s173 = sphi 0, %s171
      %s174 = sphi 0, %s173
      %s188 = sphi 0, %s174
      %s192 = sphi 0, %s192
      %s194 = sphi 0, %s192
      %s195 = sphi 0, %s194
      %s209 = sphi 0, %s195
      %s215 = sphi 0, %s217
      %s218 = sphi 0, %s215
      %s219 = sphi 0, %s218
      %s235 = sphi 0, %s219
      %s241 = sphi 0, %s243
      %s244 = sphi 0, %s241
      %s245 = sphi 0, %s244
      %s261 = sphi 0, %s245
      %s267 = sphi 0, %s269
      %s270 = sphi 0, %s267
      %s271 = sphi 0, %s270
      %s287 = sphi 0, %s271
      %s293 = sphi 0, %s295
      %s296 = sphi 0, %s293
      %s297 = sphi 0, %s296
      %s313 = sphi 0, %s297
    $region4: #{tpu_custom_call.1} parent=1 // loop_header_branch
      %35 = sbr.rel (%p33) target = $region8
    $region5: #{tpu_custom_call.1} parent=1 // loop_body
      %s37 = ssub.s32 %s32, 1
      %s38 = ssub.s32 %s32, 2
      %s39 = sadd.s32 %s32, 1
      %s40 = ssub.s32 %s32, %s39
      %p41 = scmp.eq.s32.totalorder %s40, 0
      %s43 = sadd.s32 %s42, 1
      %s44 = scalar_select %p41, %s42, %s43
      %p47 = pneg %p41
      %p48 = scmp.eq.s32.totalorder %s32, 1
      %p49 = por %p47, %p48
      %p50 = scmp.ne.s32.totalorder %s42, %s45
      %p51 = scmp.eq.s32.totalorder %s32, 0
      %p52 = por %p50, %p51
      %p53 = scmp.ne.s32.totalorder %s42, %s45
      %p54 = scmp.eq.s32.totalorder %s37, 1
      %p55 = por %p53, %p54
      %p56 = scmp.ne.s32.totalorder %s45, %s46
      %p57 = scmp.eq.s32.totalorder %s37, 0
      %p58 = por %p56, %p57
      %p59 = scmp.ne.s32.totalorder %s45, %s46
      %p60 = scmp.eq.s32.totalorder %s38, 1
      %p61 = por %p59, %p60
      %p63 = scmp.ne.s32.totalorder %s46, %s62
      %p64 = scmp.eq.s32.totalorder %s38, 0
      %p65 = por %p63, %p64
      %s67 = sadd.s32 %s66, 1
      %p70 = scmp.eq.s32.totalorder %s32, 1
      %p71 = scmp.ne.s32.totalorder %s66, %s68
      %p72 = scmp.eq.s32.totalorder %s32, 0
      %p73 = por %p71, %p72
      %p74 = scmp.ne.s32.totalorder %s66, %s68
      %p75 = scmp.eq.s32.totalorder %s37, 1
      %p76 = por %p74, %p75
      %p77 = scmp.ne.s32.totalorder %s68, %s69
      %p78 = scmp.eq.s32.totalorder %s37, 0
      %p79 = por %p77, %p78
      %p80 = scmp.ne.s32.totalorder %s68, %s69
      %p81 = scmp.eq.s32.totalorder %s38, 1
      %p82 = por %p80, %p81
      %p84 = scmp.ne.s32.totalorder %s69, %s83
      %p85 = scmp.eq.s32.totalorder %s38, 0
      %p86 = por %p84, %p85
      %s88 = sadd.s32 %s87, 1
      %p91 = scmp.eq.s32.totalorder %s32, 1
      %p92 = scmp.ne.s32.totalorder %s87, %s89
      %p93 = scmp.eq.s32.totalorder %s32, 0
      %p94 = por %p92, %p93
      %p95 = scmp.ne.s32.totalorder %s87, %s89
      %p96 = scmp.eq.s32.totalorder %s37, 1
      %p97 = por %p95, %p96
      %p98 = scmp.ne.s32.totalorder %s89, %s90
      %p99 = scmp.eq.s32.totalorder %s37, 0
      %p100 = por %p98, %p99
      %p101 = scmp.ne.s32.totalorder %s89, %s90
      %p102 = scmp.eq.s32.totalorder %s38, 1
      %p103 = por %p101, %p102
      %p105 = scmp.ne.s32.totalorder %s90, %s104
      %p106 = scmp.eq.s32.totalorder %s38, 0
      %p107 = por %p105, %p106
      %s109 = sadd.s32 %s108, 1
      %p112 = scmp.eq.s32.totalorder %s32, 1
      %p113 = scmp.ne.s32.totalorder %s108, %s110
      %p114 = scmp.eq.s32.totalorder %s32, 0
      %p115 = por %p113, %p114
      %p116 = scmp.ne.s32.totalorder %s108, %s110
      %p117 = scmp.eq.s32.totalorder %s37, 1
      %p118 = por %p116, %p117
      %p119 = scmp.ne.s32.totalorder %s110, %s111
      %p120 = scmp.eq.s32.totalorder %s37, 0
      %p121 = por %p119, %p120
      %p122 = scmp.ne.s32.totalorder %s110, %s111
      %p123 = scmp.eq.s32.totalorder %s38, 1
      %p124 = por %p122, %p123
      %p126 = scmp.ne.s32.totalorder %s111, %s125
      %p127 = scmp.eq.s32.totalorder %s38, 0
      %p128 = por %p126, %p127
      %s130 = sadd.s32 %s129, 1
      %p133 = scmp.eq.s32.totalorder %s32, 1
      %p134 = scmp.ne.s32.totalorder %s129, %s131
      %p135 = scmp.eq.s32.totalorder %s32, 0
      %p136 = por %p134, %p135
      %p137 = scmp.ne.s32.totalorder %s129, %s131
      %p138 = scmp.eq.s32.totalorder %s37, 1
      %p139 = por %p137, %p138
      %p140 = scmp.ne.s32.totalorder %s131, %s132
      %p141 = scmp.eq.s32.totalorder %s37, 0
      %p142 = por %p140, %p141
      %p143 = scmp.ne.s32.totalorder %s131, %s132
      %p144 = scmp.eq.s32.totalorder %s38, 1
      %p145 = por %p143, %p144
      %p147 = scmp.ne.s32.totalorder %s132, %s146
      %p148 = scmp.eq.s32.totalorder %s38, 0
      %p149 = por %p147, %p148
      %s151 = sadd.s32 %s150, 1
      %p154 = scmp.eq.s32.totalorder %s32, 1
      %p155 = scmp.ne.s32.totalorder %s150, %s152
      %p156 = scmp.eq.s32.totalorder %s32, 0
      %p157 = por %p155, %p156
      %p158 = scmp.ne.s32.totalorder %s150, %s152
      %p159 = scmp.eq.s32.totalorder %s37, 1
      %p160 = por %p158, %p159
      %p161 = scmp.ne.s32.totalorder %s152, %s153
      %p162 = scmp.eq.s32.totalorder %s37, 0
      %p163 = por %p161, %p162
      %p164 = scmp.ne.s32.totalorder %s152, %s153
      %p165 = scmp.eq.s32.totalorder %s38, 1
      %p166 = por %p164, %p165
      %p168 = scmp.ne.s32.totalorder %s153, %s167
      %p169 = scmp.eq.s32.totalorder %s38, 0
      %p170 = por %p168, %p169
      %s172 = sadd.s32 %s171, 1
      %p175 = scmp.eq.s32.totalorder %s32, 1
      %p176 = scmp.ne.s32.totalorder %s171, %s173
      %p177 = scmp.eq.s32.totalorder %s32, 0
      %p178 = por %p176, %p177
      %p179 = scmp.ne.s32.totalorder %s171, %s173
      %p180 = scmp.eq.s32.totalorder %s37, 1
      %p181 = por %p179, %p180
      %p182 = scmp.ne.s32.totalorder %s173, %s174
      %p183 = scmp.eq.s32.totalorder %s37, 0
      %p184 = por %p182, %p183
      %p185 = scmp.ne.s32.totalorder %s173, %s174
      %p186 = scmp.eq.s32.totalorder %s38, 1
      %p187 = por %p185, %p186
      %p189 = scmp.ne.s32.totalorder %s174, %s188
      %p190 = scmp.eq.s32.totalorder %s38, 0
      %p191 = por %p189, %p190
      %s193 = sadd.s32 %s192, 1
      %p196 = scmp.eq.s32.totalorder %s32, 1
      %p197 = scmp.ne.s32.totalorder %s192, %s194
      %p198 = scmp.eq.s32.totalorder %s32, 0
      %p199 = por %p197, %p198
      %p200 = scmp.ne.s32.totalorder %s192, %s194
      %p201 = scmp.eq.s32.totalorder %s37, 1
      %p202 = por %p200, %p201
      %p203 = scmp.ne.s32.totalorder %s194, %s195
      %p204 = scmp.eq.s32.totalorder %s37, 0
      %p205 = por %p203, %p204
      %p206 = scmp.ne.s32.totalorder %s194, %s195
      %p207 = scmp.eq.s32.totalorder %s38, 1
      %p208 = por %p206, %p207
      %p210 = scmp.ne.s32.totalorder %s195, %s209
      %p211 = scmp.eq.s32.totalorder %s38, 0
      %p212 = por %p210, %p211
      %s213 = ssub.s32 %s32, %s39
      %p214 = scmp.eq.s32.totalorder %s213, 0
      %s216 = sadd.s32 %s215, 1
      %s217 = scalar_select %p214, %s215, %s216
      %p220 = pneg %p214
      %p221 = scmp.eq.s32.totalorder %s32, 1
      %p222 = por %p220, %p221
      %p223 = scmp.ne.s32.totalorder %s215, %s218
      %p224 = scmp.eq.s32.totalorder %s32, 0
      %p225 = por %p223, %p224
      %p226 = scmp.ne.s32.totalorder %s215, %s218
      %p227 = scmp.eq.s32.totalorder %s37, 1
      %p228 = por %p226, %p227
      %p229 = scmp.ne.s32.totalorder %s218, %s219
      %p230 = scmp.eq.s32.totalorder %s37, 0
      %p231 = por %p229, %p230
      %p232 = scmp.ne.s32.totalorder %s218, %s219
      %p233 = scmp.eq.s32.totalorder %s38, 1
      %p234 = por %p232, %p233
      %p236 = scmp.ne.s32.totalorder %s219, %s235
      %p237 = scmp.eq.s32.totalorder %s38, 0
      %p238 = por %p236, %p237
      %s239 = ssub.s32 %s32, %s39
      %p240 = scmp.eq.s32.totalorder %s239, 0
      %s242 = sadd.s32 %s241, 1
      %s243 = scalar_select %p240, %s241, %s242
      %p246 = pneg %p240
      %p247 = scmp.eq.s32.totalorder %s32, 1
      %p248 = por %p246, %p247
      %p249 = scmp.ne.s32.totalorder %s241, %s244
      %p250 = scmp.eq.s32.totalorder %s32, 0
      %p251 = por %p249, %p250
      %p252 = scmp.ne.s32.totalorder %s241, %s244
      %p253 = scmp.eq.s32.totalorder %s37, 1
      %p254 = por %p252, %p253
      %p255 = scmp.ne.s32.totalorder %s244, %s245
      %p256 = scmp.eq.s32.totalorder %s37, 0
      %p257 = por %p255, %p256
      %p258 = scmp.ne.s32.totalorder %s244, %s245
      %p259 = scmp.eq.s32.totalorder %s38, 1
      %p260 = por %p258, %p259
      %p262 = scmp.ne.s32.totalorder %s245, %s261
      %p263 = scmp.eq.s32.totalorder %s38, 0
      %p264 = por %p262, %p263
      %s265 = ssub.s32 %s32, %s39
      %p266 = scmp.eq.s32.totalorder %s265, 0
      %s268 = sadd.s32 %s267, 1
      %s269 = scalar_select %p266, %s267, %s268
      %p272 = pneg %p266
      %p273 = scmp.eq.s32.totalorder %s32, 1
      %p274 = por %p272, %p273
      %p275 = scmp.ne.s32.totalorder %s267, %s270
      %p276 = scmp.eq.s32.totalorder %s32, 0
      %p277 = por %p275, %p276
      %p278 = scmp.ne.s32.totalorder %s267, %s270
      %p279 = scmp.eq.s32.totalorder %s37, 1
      %p280 = por %p278, %p279
      %p281 = scmp.ne.s32.totalorder %s270, %s271
      %p282 = scmp.eq.s32.totalorder %s37, 0
      %p283 = por %p281, %p282
      %p284 = scmp.ne.s32.totalorder %s270, %s271
      %p285 = scmp.eq.s32.totalorder %s38, 1
      %p286 = por %p284, %p285
      %p288 = scmp.ne.s32.totalorder %s271, %s287
      %p289 = scmp.eq.s32.totalorder %s38, 0
      %p290 = por %p288, %p289
      %s291 = ssub.s32 %s32, %s39
      %p292 = scmp.eq.s32.totalorder %s291, 0
      %s294 = sadd.s32 %s293, 1
      %s295 = scalar_select %p292, %s293, %s294
      %p298 = pneg %p292
      %p299 = scmp.eq.s32.totalorder %s32, 1
      %p300 = por %p298, %p299
      %p301 = scmp.ne.s32.totalorder %s293, %s296
      %p302 = scmp.eq.s32.totalorder %s32, 0
      %p303 = por %p301, %p302
      %p304 = scmp.ne.s32.totalorder %s293, %s296
      %p305 = scmp.eq.s32.totalorder %s37, 1
      %p306 = por %p304, %p305
      %p307 = scmp.ne.s32.totalorder %s296, %s297
      %p308 = scmp.eq.s32.totalorder %s37, 0
      %p309 = por %p307, %p308
      %p310 = scmp.ne.s32.totalorder %s296, %s297
      %p311 = scmp.eq.s32.totalorder %s38, 1
      %p312 = por %p310, %p311
      %p314 = scmp.ne.s32.totalorder %s297, %s313
      %p315 = scmp.eq.s32.totalorder %s38, 0
      %p316 = por %p314, %p315
      %p317 = scmp.le.s32.totalorder 1, %s32
      %p318 = scmp.lt.s32.totalorder %s32, 3
      %p319 = pnand %p317, %p318
      %p320 = pneg %p319
      // Predicated region
      $region9: #{tpu_custom_call.1} parent=5 // pred_check
        _
      $region10: #{tpu_custom_call.1} parent=5 // pred_check_branch
        %322 = sbr.rel (%p319) target = $region12
      $region11: #{tpu_custom_call.1} parent=5 // pred_region
        %s323 = ssub.s32 %s32, 1
        // Predicated region
        $region13: #{tpu_custom_call.1} parent=11 // pred_check
          %p324 = pneg %p79
        $region14: #{tpu_custom_call.1} parent=11 // pred_check_branch
          %326 = sbr.rel (%p324) target = $region16
        $region15: #{tpu_custom_call.1} parent=11 // pred_region
          %s328 = ssub.s32 1024, 1024
          %329 = vsyncadd [#allocation6], %s328
          %s330 = sshll.u32 [#allocation5], 4
          %s331 = int_to_ptr.vmem [resolvable:$true] %s330
          %336 = dma.hbm_to_vmem [thread:$0]  %s1, 1024, %s331, [#allocation6], 128, 128, 8
        $region16: #{tpu_custom_call.1} parent=11 // pred_fallthru
          _
        // Predicated region
        $region17: #{tpu_custom_call.1} parent=11 // pred_check
          %p337 = pneg %p100
        $region18: #{tpu_custom_call.1} parent=11 // pred_check_branch
          %339 = sbr.rel (%p337) target = $region20
        $region19: #{tpu_custom_call.1} parent=11 // pred_region
          _
        $region20: #{tpu_custom_call.1} parent=11 // pred_fallthru
          _
        // Predicated region
        $region21: #{tpu_custom_call.1} parent=11 // pred_check
          %p340 = pneg %p121
        $region22: #{tpu_custom_call.1} parent=11 // pred_check_branch
          %342 = sbr.rel (%p340) target = $region24
        $region23: #{tpu_custom_call.1} parent=11 // pred_region
          _
        $region24: #{tpu_custom_call.1} parent=11 // pred_fallthru
          _
        // Predicated region
        $region25: #{tpu_custom_call.1} parent=11 // pred_check
          %p343 = pneg %p142
        $region26: #{tpu_custom_call.1} parent=11 // pred_check_branch
          %345 = sbr.rel (%p343) target = $region28
        $region27: #{tpu_custom_call.1} parent=11 // pred_region
          %s347 = ssub.s32 1024, 1024
          %348 = vsyncadd [#allocation6], %s347
          %s349 = sshll.u32 [#allocation7], 4
          %s350 = int_to_ptr.vmem [resolvable:$true] %s349
          %355 = dma.hbm_to_vmem [thread:$0]  %s4, 1024, %s350, [#allocation6], 128, 128, 8
        $region28: #{tpu_custom_call.1} parent=11 // pred_fallthru
          _
        // Predicated region
        $region29: #{tpu_custom_call.1} parent=11 // pred_check
          %p356 = pneg %p163
        $region30: #{tpu_custom_call.1} parent=11 // pred_check_branch
          %358 = sbr.rel (%p356) target = $region32
        $region31: #{tpu_custom_call.1} parent=11 // pred_region
          _
        $region32: #{tpu_custom_call.1} parent=11 // pred_fallthru
          _
        // Predicated region
        $region33: #{tpu_custom_call.1} parent=11 // pred_check
          %p359 = pneg %p184
        $region34: #{tpu_custom_call.1} parent=11 // pred_check_branch
          %361 = sbr.rel (%p359) target = $region36
        $region35: #{tpu_custom_call.1} parent=11 // pred_region
          %s363 = ssub.s32 1024, 1024
          %364 = vsyncadd [#allocation9], %s363
          %s365 = sshll.u32 [#allocation8], 4
          %s366 = int_to_ptr.vmem [resolvable:$true] %s365
          %371 = dma.hbm_to_vmem [thread:$0]  %s6, 1024, %s366, [#allocation9], 128, 128, 8
        $region36: #{tpu_custom_call.1} parent=11 // pred_fallthru
          _
        // Predicated region
        $region37: #{tpu_custom_call.1} parent=11 // pred_check
          %p372 = pneg %p205
        $region38: #{tpu_custom_call.1} parent=11 // pred_check_branch
          %374 = sbr.rel (%p372) target = $region40
        $region39: #{tpu_custom_call.1} parent=11 // pred_region
          _
        $region40: #{tpu_custom_call.1} parent=11 // pred_fallthru
          _
      $region12: #{tpu_custom_call.1} parent=5 // pred_fallthru
        _
      %p375 = scmp.lt.s32.totalorder %s32, 2
      // Predicated region
      $region41: #{tpu_custom_call.1} parent=5 // pred_check
        %p376 = pneg %p375
      $region42: #{tpu_custom_call.1} parent=5 // pred_check_branch
        %378 = sbr.rel (%p376) target = $region44
      $region43: #{tpu_custom_call.1} parent=5 // pred_region
        // Predicated region
        $region45: #{tpu_custom_call.1} parent=43 // pred_check
          %p379 = pneg %p52
        $region46: #{tpu_custom_call.1} parent=43 // pred_check_branch
          %381 = sbr.rel (%p379) target = $region48
        $region47: #{tpu_custom_call.1} parent=43 // pred_region
          %s382 = sand.u32 %s42, 1
          %s383 = scalar_lea.sflag [#allocation3], %s382
          %s384 = sand.u32 %s42, 1
          %s385 = smul.addr %s384, 64
          %s386 = scalar_lea.vmem [#allocation2], %s385
          %s388 = ssub.s32 1024, 1024
          %389 = vsyncadd %s383, %s388
          %s390 = smul.addr %s32, 8
          %s391 = smul.addr %s390, 128
          %s392 = scalar_lea.hbm %s0, %s391
          %s393 = sshll.u32 %s386, 4
          %s394 = int_to_ptr.vmem [resolvable:$true] %s393
          %399 = dma.hbm_to_vmem [thread:$0]  %s392, 1024, %s394, %s383, 128, 128, 8
        $region48: #{tpu_custom_call.1} parent=43 // pred_fallthru
          _
      $region44: #{tpu_custom_call.1} parent=5 // pred_fallthru
        _
      %p400 = scmp.le.s32.totalorder 1, %s32
      %p401 = scmp.lt.s32.totalorder %s32, 3
      %p402 = pnand %p400, %p401
      %p403 = pneg %p402
      // Predicated region
      $region49: #{tpu_custom_call.1} parent=5 // pred_check
        _
      $region50: #{tpu_custom_call.1} parent=5 // pred_check_branch
        %405 = sbr.rel (%p402) target = $region52
      $region51: #{tpu_custom_call.1} parent=5 // pred_region
        %s406 = ssub.s32 %s32, 1
        %s407 = sand.u32 %s45, 1
        %s408 = scalar_lea.sflag [#allocation3], %s407
        %s409 = sand.u32 %s45, 1
        %s410 = smul.addr %s409, 64
        %s411 = scalar_lea.vmem [#allocation2], %s410
        // Predicated region
        $region53: #{tpu_custom_call.1} parent=51 // pred_check
          %p412 = pneg %p58
        $region54: #{tpu_custom_call.1} parent=51 // pred_check_branch
          %414 = sbr.rel (%p412) target = $region56
        $region55: #{tpu_custom_call.1} parent=51 // pred_region
          %415 = dma.done %s408, 1024
        $region56: #{tpu_custom_call.1} parent=51 // pred_fallthru
          _
        // Predicated region
        $region57: #{tpu_custom_call.1} parent=51 // pred_check
          %p416 = pneg %p79
        $region58: #{tpu_custom_call.1} parent=51 // pred_check_branch
          %418 = sbr.rel (%p416) target = $region60
        $region59: #{tpu_custom_call.1} parent=51 // pred_region
          %419 = dma.done [#allocation6], 1024
        $region60: #{tpu_custom_call.1} parent=51 // pred_fallthru
          _
        // Predicated region
        $region61: #{tpu_custom_call.1} parent=51 // pred_check
          %p420 = pneg %p142
        $region62: #{tpu_custom_call.1} parent=51 // pred_check_branch
          %422 = sbr.rel (%p420) target = $region64
        $region63: #{tpu_custom_call.1} parent=51 // pred_region
          %423 = dma.done [#allocation6], 1024
        $region64: #{tpu_custom_call.1} parent=51 // pred_fallthru
          _
        // Predicated region
        $region65: #{tpu_custom_call.1} parent=51 // pred_check
          %p424 = pneg %p184
        $region66: #{tpu_custom_call.1} parent=51 // pred_check_branch
          %426 = sbr.rel (%p424) target = $region68
        $region67: #{tpu_custom_call.1} parent=51 // pred_region
          %427 = dma.done [#allocation9], 1024
        $region68: #{tpu_custom_call.1} parent=51 // pred_fallthru
          _
        %s428 = sand.u32 %s45, 1
        %s429 = scalar_lea.sflag [#allocation3], %s428
        %s430 = sand.u32 %s45, 1
        %s431 = smul.addr %s430, 64
        %s432 = scalar_lea.vmem [#allocation2], %s431
        %p433 = pneg %p58
        %p434 = pneg %p55
        %p435 = pneg %p79
        %p436 = pneg %p76
        %p437 = pneg %p100
        %p438 = pneg %p97
        %p439 = pneg %p121
        %p440 = pneg %p118
        %p441 = pneg %p142
        %p442 = pneg %p139
        %p443 = pneg %p163
        %p444 = pneg %p160
        %p445 = pneg %p184
        %p446 = pneg %p181
        %p447 = pneg %p205
        %p448 = pneg %p202
        %p449 = pneg %p231
        %p450 = pneg %p228
        %s451 = sand.u32 %s218, 1
        %s452 = scalar_lea.sflag [#allocation4], %s451
        %s453 = sand.u32 %s218, 1
        %s454 = smul.addr %s453, 64
        %s455 = scalar_lea.vmem [#allocation10], %s454
        %p456 = pneg %p257
        %p457 = pneg %p254
        %s458 = sand.u32 %s37, 1
        %s459 = scalar_lea.sflag [#allocation12], %s458
        %s460 = sand.u32 %s244, 1
        %s461 = smul.addr %s460, 64
        %s462 = scalar_lea.vmem [#allocation11], %s461
        %p463 = pneg %p283
        %p464 = pneg %p280
        %s465 = sand.u32 %s37, 1
        %s466 = scalar_lea.sflag [#allocation12], %s465
        %s467 = sand.u32 %s270, 1
        %s468 = smul.addr %s467, 64
        %s469 = scalar_lea.vmem [#allocation13], %s468
        %p470 = pneg %p309
        %p471 = pneg %p306
        %s472 = sand.u32 %s296, 1
        %s473 = scalar_lea.sflag [#allocation15], %s472
        %s474 = sand.u32 %s296, 1
        %s475 = smul.addr %s474, 64
        %s476 = scalar_lea.vmem [#allocation14], %s475
        %v477 = vld [vmem:[%s411] sm:$0xff]
        %v478 = vld [vmem:[%s411 + $0x8] sm:$0xff]
        %v479 = vld [vmem:[%s411 + $0x10] sm:$0xff]
        %v480 = vld [vmem:[%s411 + $0x18] sm:$0xff]
        %v481 = vld [vmem:[%s411 + $0x20] sm:$0xff]
        %v482 = vld [vmem:[%s411 + $0x28] sm:$0xff]
        %v483 = vld [vmem:[%s411 + $0x30] sm:$0xff]
        %v484 = vld [vmem:[%s411 + $0x38] sm:$0xff]
        %v485 = vld [vmem:[#allocation5] sm:$0xff]
        %v486 = vld [vmem:[#allocation5 + $0x8] sm:$0xff]
        %v487 = vld [vmem:[#allocation5 + $0x10] sm:$0xff]
        %v488 = vld [vmem:[#allocation5 + $0x18] sm:$0xff]
        %v489 = vld [vmem:[#allocation5 + $0x20] sm:$0xff]
        %v490 = vld [vmem:[#allocation5 + $0x28] sm:$0xff]
        %v491 = vld [vmem:[#allocation5 + $0x30] sm:$0xff]
        %v492 = vld [vmem:[#allocation5 + $0x38] sm:$0xff]
        %v493 = vadd.f32 %v477, %v485
        %v494 = vadd.f32 %v478, %v486
        %v495 = vadd.f32 %v479, %v487
        %v496 = vadd.f32 %v480, %v488
        %v497 = vadd.f32 %v481, %v489
        %v498 = vadd.f32 %v482, %v490
        %v499 = vadd.f32 %v483, %v491
        %v500 = vadd.f32 %v484, %v492
        %vm501 = vcmask 523264
        %v502 = vsel %vm501, %v493, 0.0
        %503 = vadd.xlane.f32.xlu0 %v502
        %v504 = vpop.xlane.xlu0 %503
        %v505 = vsel %vm501, %v494, 0.0
        %506 = vadd.xlane.f32.xlu0 %v505
        %v507 = vpop.xlane.xlu0 %506
        %v508 = vsel %vm501, %v495, 0.0
        %509 = vadd.xlane.f32.xlu0 %v508
        %v510 = vpop.xlane.xlu0 %509
        %v511 = vsel %vm501, %v496, 0.0
        %512 = vadd.xlane.f32.xlu0 %v511
        %v513 = vpop.xlane.xlu0 %512
        %v514 = vsel %vm501, %v497, 0.0
        %515 = vadd.xlane.f32.xlu0 %v514
        %v516 = vpop.xlane.xlu0 %515
        %v517 = vsel %vm501, %v498, 0.0
        %518 = vadd.xlane.f32.xlu0 %v517
        %v519 = vpop.xlane.xlu0 %518
        %v520 = vsel %vm501, %v499, 0.0
        %521 = vadd.xlane.f32.xlu0 %v520
        %v522 = vpop.xlane.xlu0 %521
        %v523 = vsel %vm501, %v500, 0.0
        %524 = vadd.xlane.f32.xlu0 %v523
        %v525 = vpop.xlane.xlu0 %524
        %v526 = vrcp.pop 64.0
        %v527 = vmul.f32 %v504, %v526
        %v528 = vmul.f32 %v507, %v526
        %v529 = vmul.f32 %v510, %v526
        %v530 = vmul.f32 %v513, %v526
        %v531 = vmul.f32 %v516, %v526
        %v532 = vmul.f32 %v519, %v526
        %v533 = vmul.f32 %v522, %v526
        %v534 = vmul.f32 %v525, %v526
        %v535 = vsub.f32 %v493, %v527
        %v536 = vsub.f32 %v494, %v528
        %v537 = vsub.f32 %v495, %v529
        %v538 = vsub.f32 %v496, %v530
        %v539 = vsub.f32 %v497, %v531
        %v540 = vsub.f32 %v498, %v532
        %v541 = vsub.f32 %v499, %v533
        %v542 = vsub.f32 %v500, %v534
        %v543 = vmul.f32 %v535, %v535
        %v544 = vmul.f32 %v536, %v536
        %v545 = vmul.f32 %v537, %v537
        %v546 = vmul.f32 %v538, %v538
        %v547 = vmul.f32 %v539, %v539
        %v548 = vmul.f32 %v540, %v540
        %v549 = vmul.f32 %v541, %v541
        %v550 = vmul.f32 %v542, %v542
        %v551 = vsel %vm501, %v543, 0.0
        %552 = vadd.xlane.f32.xlu0 %v551
        %v553 = vpop.xlane.xlu0 %552
        %v554 = vsel %vm501, %v544, 0.0
        %555 = vadd.xlane.f32.xlu0 %v554
        %v556 = vpop.xlane.xlu0 %555
        %v557 = vsel %vm501, %v545, 0.0
        %558 = vadd.xlane.f32.xlu0 %v557
        %v559 = vpop.xlane.xlu0 %558
        %v560 = vsel %vm501, %v546, 0.0
        %561 = vadd.xlane.f32.xlu0 %v560
        %v562 = vpop.xlane.xlu0 %561
        %v563 = vsel %vm501, %v547, 0.0
        %564 = vadd.xlane.f32.xlu0 %v563
        %v565 = vpop.xlane.xlu0 %564
        %v566 = vsel %vm501, %v548, 0.0
        %567 = vadd.xlane.f32.xlu0 %v566
        %v568 = vpop.xlane.xlu0 %567
        %v569 = vsel %vm501, %v549, 0.0
        %570 = vadd.xlane.f32.xlu0 %v569
        %v571 = vpop.xlane.xlu0 %570
        %v572 = vsel %vm501, %v550, 0.0
        %573 = vadd.xlane.f32.xlu0 %v572
        %v574 = vpop.xlane.xlu0 %573
        %v575 = vmul.f32 %v553, %v526
        %v576 = vmul.f32 %v556, %v526
        %v577 = vmul.f32 %v559, %v526
        %v578 = vmul.f32 %v562, %v526
        %v579 = vmul.f32 %v565, %v526
        %v580 = vmul.f32 %v568, %v526
        %v581 = vmul.f32 %v571, %v526
        %v582 = vmul.f32 %v574, %v526
        %v583 = vadd.f32 %v575, 1e-05
        %v584 = vadd.f32 %v576, 1e-05
        %v585 = vadd.f32 %v577, 1e-05
        %v586 = vadd.f32 %v578, 1e-05
        %v587 = vadd.f32 %v579, 1e-05
        %v588 = vadd.f32 %v580, 1e-05
        %v589 = vadd.f32 %v581, 1e-05
        %v590 = vadd.f32 %v582, 1e-05
        %v591 = vrsqrt.pop %v583
        %v592 = vrsqrt.pop %v584
        %v593 = vrsqrt.pop %v585
        %v594 = vrsqrt.pop %v586
        %v595 = vrsqrt.pop %v587
        %v596 = vrsqrt.pop %v588
        %v597 = vrsqrt.pop %v589
        %v598 = vrsqrt.pop %v590
        %v599 = vmul.f32 %v535, %v591
        %v600 = vmul.f32 %v536, %v592
        %v601 = vmul.f32 %v537, %v593
        %v602 = vmul.f32 %v538, %v594
        %v603 = vmul.f32 %v539, %v595
        %v604 = vmul.f32 %v540, %v596
        %v605 = vmul.f32 %v541, %v597
        %v606 = vmul.f32 %v542, %v598
        %v607 = vld [vmem:[%s2] sm:$0x1]
        %v609 = vlaneseq
        %v610 = vshrl.u32 %v609, 7
        %v611 = vsub.s32 0, %v610
        %v612 = vrot.slane %v607, %v611
        %v614 = vmul.f32 %v599, %v612
        %v615 = vmul.f32 %v600, %v612
        %v616 = vmul.f32 %v601, %v612
        %v617 = vmul.f32 %v602, %v612
        %v618 = vmul.f32 %v603, %v612
        %v619 = vmul.f32 %v604, %v612
        %v620 = vmul.f32 %v605, %v612
        %v621 = vmul.f32 %v606, %v612
        %v622 = vld [vmem:[%s3] sm:$0x1]
        %v624 = vlaneseq
        %v625 = vshrl.u32 %v624, 7
        %v626 = vsub.s32 0, %v625
        %v627 = vrot.slane %v622, %v626
        %v629 = vadd.f32 %v614, %v627
        %v630 = vadd.f32 %v615, %v627
        %v631 = vadd.f32 %v616, %v627
        %v632 = vadd.f32 %v617, %v627
        %v633 = vadd.f32 %v618, %v627
        %v634 = vadd.f32 %v619, %v627
        %v635 = vadd.f32 %v620, %v627
        %v636 = vadd.f32 %v621, %v627
        %v637 = vld [vmem:[#allocation7] sm:$0xff]
        %v638 = vld [vmem:[#allocation7 + $0x8] sm:$0xff]
        %v639 = vld [vmem:[#allocation7 + $0x10] sm:$0xff]
        %v640 = vld [vmem:[#allocation7 + $0x18] sm:$0xff]
        %v641 = vld [vmem:[#allocation7 + $0x20] sm:$0xff]
        %v642 = vld [vmem:[#allocation7 + $0x28] sm:$0xff]
        %v643 = vld [vmem:[#allocation7 + $0x30] sm:$0xff]
        %v644 = vld [vmem:[#allocation7 + $0x38] sm:$0xff]
        %v645 = vld [vmem:[%s5] sm:$0x1]
        %v647 = vlaneseq
        %v648 = vshrl.u32 %v647, 7
        %v649 = vsub.s32 0, %v648
        %v650 = vrot.slane %v645, %v649
        %v653 = vsel %vm501, %v629, 0
        %v656 = vsel %vm501, %v630, 0
        %v659 = vsel %vm501, %v631, 0
        %v662 = vsel %vm501, %v632, 0
        %v665 = vsel %vm501, %v633, 0
        %v668 = vsel %vm501, %v634, 0
        %v671 = vsel %vm501, %v635, 0
        %v674 = vsel %vm501, %v636, 0
        %676 = vmatprep.subr.mxu0 0.0
        %677 = vmatpush1.msra.mxu0 %v637
        %678 = vmatprep.subr.mxu0 0.0
        %679 = vmatpush1.msra.mxu0 %v638
        %680 = vmatprep.subr.mxu0 0.0
        %681 = vmatpush1.msra.mxu0 %v639
        %682 = vmatprep.subr.mxu0 0.0
        %683 = vmatpush1.msra.mxu0 %v640
        %684 = vmatprep.subr.mxu0 0.0
        %685 = vmatpush1.msra.mxu0 %v641
        %686 = vmatprep.subr.mxu0 0.0
        %687 = vmatpush1.msra.mxu0 %v642
        %688 = vmatprep.subr.mxu0 0.0
        %689 = vmatpush1.msra.mxu0 %v643
        %690 = vmatprep.subr.mxu0 0.0
        %691 = vmatpush1.msra.mxu0 %v644
        %692 = vmatprep.subr.mxu0 0.0
        %693 = vmatpush1.msra.mxu0 0.0
        %694 = vmatprep.subr.mxu0 0.0
        %695 = vmatpush1.msra.mxu0 0.0
        %696 = vmatprep.subr.mxu0 0.0
        %697 = vmatpush1.msra.mxu0 0.0
        %698 = vmatprep.subr.mxu0 0.0
        %699 = vmatpush1.msra.mxu0 0.0
        %700 = vmatprep.subr.mxu0 0.0
        %701 = vmatpush1.msra.mxu0 0.0
        %702 = vmatprep.subr.mxu0 0.0
        %703 = vmatpush1.msra.mxu0 0.0
        %704 = vmatprep.subr.mxu0 0.0
        %705 = vmatpush1.msra.mxu0 0.0
        %706 = vmatprep.subr.mxu0 0.0
        %707 = vmatpush1.msra.mxu0 0.0
        %708 = vmatprep.subr.mxu0 0.0
        %709 = vmatpush1.msra.mxu0 0.0
        %710 = vmatprep.subr.mxu0 0.0
        %711 = vmatpush1.msra.mxu0 0.0
        %712 = vmatprep.subr.mxu0 0.0
        %713 = vmatpush1.msra.mxu0 0.0
        %714 = vmatprep.subr.mxu0 0.0
        %715 = vmatpush1.msra.mxu0 0.0
        %716 = vmatprep.subr.mxu0 0.0
        %717 = vmatpush1.msra.mxu0 0.0
        %718 = vmatprep.subr.mxu0 0.0
        %719 = vmatpush1.msra.mxu0 0.0
        %720 = vmatprep.subr.mxu0 0.0
        %721 = vmatpush1.msra.mxu0 0.0
        %722 = vmatprep.subr.mxu0 0.0
        %723 = vmatpush1.msra.mxu0 0.0
        %724 = vmatprep.subr.mxu0 0.0
        %725 = vmatpush1.msra.mxu0 0.0
        %726 = vmatprep.subr.mxu0 0.0
        %727 = vmatpush1.msra.mxu0 0.0
        %728 = vmatprep.subr.mxu0 0.0
        %729 = vmatpush1.msra.mxu0 0.0
        %730 = vmatprep.subr.mxu0 0.0
        %731 = vmatpush1.msra.mxu0 0.0
        %732 = vmatprep.subr.mxu0 0.0
        %733 = vmatpush1.msra.mxu0 0.0
        %734 = vmatprep.subr.mxu0 0.0
        %735 = vmatpush1.msra.mxu0 0.0
        %736 = vmatprep.subr.mxu0 0.0
        %737 = vmatpush1.msra.mxu0 0.0
        %738 = vmatprep.subr.mxu0 0.0
        %739 = vmatpush1.msra.mxu0 0.0
        %740 = vmatprep.mubr.f32.mxu0 0.0
        %741 = vmatmul.mubr.f32.gmra.mrb[0].mxu0 %v653
        %v742 = vpop.f32.mrb[0].mxu0
        %v743 = vadd.f32 %v650, %v742
        %v744 = vpop.f32.mrb[0].mxu0
        %745 = vmatprep.mubr.f32.mxu0 0.0
        %746 = vmatmul.mubr.f32.gmra.mrb[0].mxu0 %v656
        %v747 = vpop.f32.mrb[0].mxu0
        %v748 = vadd.f32 %v650, %v747
        %v749 = vpop.f32.mrb[0].mxu0
        %750 = vmatprep.mubr.f32.mxu0 0.0
        %751 = vmatmul.mubr.f32.gmra.mrb[0].mxu0 %v659
        %v752 = vpop.f32.mrb[0].mxu0
        %v753 = vadd.f32 %v650, %v752
        %v754 = vpop.f32.mrb[0].mxu0
        %755 = vmatprep.mubr.f32.mxu0 0.0
        %756 = vmatmul.mubr.f32.gmra.mrb[0].mxu0 %v662
        %v757 = vpop.f32.mrb[0].mxu0
        %v758 = vadd.f32 %v650, %v757
        %v759 = vpop.f32.mrb[0].mxu0
        %760 = vmatprep.mubr.f32.mxu0 0.0
        %761 = vmatmul.mubr.f32.gmra.mrb[0].mxu0 %v665
        %v762 = vpop.f32.mrb[0].mxu0
        %v763 = vadd.f32 %v650, %v762
        %v764 = vpop.f32.mrb[0].mxu0
        %765 = vmatprep.mubr.f32.mxu0 0.0
        %766 = vmatmul.mubr.f32.gmra.mrb[0].mxu0 %v668
        %v767 = vpop.f32.mrb[0].mxu0
        %v768 = vadd.f32 %v650, %v767
        %v769 = vpop.f32.mrb[0].mxu0
        %770 = vmatprep.mubr.f32.mxu0 0.0
        %771 = vmatmul.mubr.f32.gmra.mrb[0].mxu0 %v671
        %v772 = vpop.f32.mrb[0].mxu0
        %v773 = vadd.f32 %v650, %v772
        %v774 = vpop.f32.mrb[0].mxu0
        %775 = vmatprep.mubr.f32.mxu0 0.0
        %776 = vmatmul.mubr.f32.gmra.mrb[0].mxu0 %v674
        %v777 = vpop.f32.mrb[0].mxu0
        %v778 = vadd.f32 %v650, %v777
        %v779 = vpop.f32.mrb[0].mxu0
        %780 = vdwg.mxu0
        %v781 = vld [vmem:[#allocation8] sm:$0xff]
        %v782 = vld [vmem:[#allocation8 + $0x8] sm:$0xff]
        %v783 = vld [vmem:[#allocation8 + $0x10] sm:$0xff]
        %v784 = vld [vmem:[#allocation8 + $0x18] sm:$0xff]
        %v785 = vld [vmem:[#allocation8 + $0x20] sm:$0xff]
        %v786 = vld [vmem:[#allocation8 + $0x28] sm:$0xff]
        %v787 = vld [vmem:[#allocation8 + $0x30] sm:$0xff]
        %v788 = vld [vmem:[#allocation8 + $0x38] sm:$0xff]
        %v789 = vld [vmem:[%s7] sm:$0x1]
        %v791 = vlaneseq
        %v792 = vshrl.u32 %v791, 7
        %v793 = vsub.s32 0, %v792
        %v794 = vrot.slane %v789, %v793
        %796 = vmatprep.subr.mxu0 0.0
        %797 = vmatpush1.msra.mxu0 %v781
        %798 = vmatprep.subr.mxu0 0.0
        %799 = vmatpush1.msra.mxu0 %v782
        %800 = vmatprep.subr.mxu0 0.0
        %801 = vmatpush1.msra.mxu0 %v783
        %802 = vmatprep.subr.mxu0 0.0
        %803 = vmatpush1.msra.mxu0 %v784
        %804 = vmatprep.subr.mxu0 0.0
        %805 = vmatpush1.msra.mxu0 %v785
        %806 = vmatprep.subr.mxu0 0.0
        %807 = vmatpush1.msra.mxu0 %v786
        %808 = vmatprep.subr.mxu0 0.0
        %809 = vmatpush1.msra.mxu0 %v787
        %810 = vmatprep.subr.mxu0 0.0
        %811 = vmatpush1.msra.mxu0 %v788
        %812 = vmatprep.subr.mxu0 0.0
        %813 = vmatpush1.msra.mxu0 0.0
        %814 = vmatprep.subr.mxu0 0.0
        %815 = vmatpush1.msra.mxu0 0.0
        %816 = vmatprep.subr.mxu0 0.0
        %817 = vmatpush1.msra.mxu0 0.0
        %818 = vmatprep.subr.mxu0 0.0
        %819 = vmatpush1.msra.mxu0 0.0
        %820 = vmatprep.subr.mxu0 0.0
        %821 = vmatpush1.msra.mxu0 0.0
        %822 = vmatprep.subr.mxu0 0.0
        %823 = vmatpush1.msra.mxu0 0.0
        %824 = vmatprep.subr.mxu0 0.0
        %825 = vmatpush1.msra.mxu0 0.0
        %826 = vmatprep.subr.mxu0 0.0
        %827 = vmatpush1.msra.mxu0 0.0
        %828 = vmatprep.subr.mxu0 0.0
        %829 = vmatpush1.msra.mxu0 0.0
        %830 = vmatprep.subr.mxu0 0.0
        %831 = vmatpush1.msra.mxu0 0.0
        %832 = vmatprep.subr.mxu0 0.0
        %833 = vmatpush1.msra.mxu0 0.0
        %834 = vmatprep.subr.mxu0 0.0
        %835 = vmatpush1.msra.mxu0 0.0
        %836 = vmatprep.subr.mxu0 0.0
        %837 = vmatpush1.msra.mxu0 0.0
        %838 = vmatprep.subr.mxu0 0.0
        %839 = vmatpush1.msra.mxu0 0.0
        %840 = vmatprep.subr.mxu0 0.0
        %841 = vmatpush1.msra.mxu0 0.0
        %842 = vmatprep.subr.mxu0 0.0
        %843 = vmatpush1.msra.mxu0 0.0
        %844 = vmatprep.subr.mxu0 0.0
        %845 = vmatpush1.msra.mxu0 0.0
        %846 = vmatprep.subr.mxu0 0.0
        %847 = vmatpush1.msra.mxu0 0.0
        %848 = vmatprep.subr.mxu0 0.0
        %849 = vmatpush1.msra.mxu0 0.0
        %850 = vmatprep.subr.mxu0 0.0
        %851 = vmatpush1.msra.mxu0 0.0
        %852 = vmatprep.subr.mxu0 0.0
        %853 = vmatpush1.msra.mxu0 0.0
        %854 = vmatprep.subr.mxu0 0.0
        %855 = vmatpush1.msra.mxu0 0.0
        %856 = vmatprep.subr.mxu0 0.0
        %857 = vmatpush1.msra.mxu0 0.0
        %858 = vmatprep.subr.mxu0 0.0
        %859 = vmatpush1.msra.mxu0 0.0
        %860 = vmatprep.mubr.f32.mxu0 0.0
        %861 = vmatmul.mubr.f32.gmra.mrb[0].mxu0 %v653
        %v862 = vpop.f32.mrb[0].mxu0
        %v863 = vadd.f32 %v794, %v862
        %v864 = vpop.f32.mrb[0].mxu0
        %865 = vmatprep.mubr.f32.mxu0 0.0
        %866 = vmatmul.mubr.f32.gmra.mrb[0].mxu0 %v656
        %v867 = vpop.f32.mrb[0].mxu0
        %v868 = vadd.f32 %v794, %v867
        %v869 = vpop.f32.mrb[0].mxu0
        %870 = vmatprep.mubr.f32.mxu0 0.0
        %871 = vmatmul.mubr.f32.gmra.mrb[0].mxu0 %v659
        %v872 = vpop.f32.mrb[0].mxu0
        %v873 = vadd.f32 %v794, %v872
        %v874 = vpop.f32.mrb[0].mxu0
        %875 = vmatprep.mubr.f32.mxu0 0.0
        %876 = vmatmul.mubr.f32.gmra.mrb[0].mxu0 %v662
        %v877 = vpop.f32.mrb[0].mxu0
        %v878 = vadd.f32 %v794, %v877
        %v879 = vpop.f32.mrb[0].mxu0
        %880 = vmatprep.mubr.f32.mxu0 0.0
        %881 = vmatmul.mubr.f32.gmra.mrb[0].mxu0 %v665
        %v882 = vpop.f32.mrb[0].mxu0
        %v883 = vadd.f32 %v794, %v882
        %v884 = vpop.f32.mrb[0].mxu0
        %885 = vmatprep.mubr.f32.mxu0 0.0
        %886 = vmatmul.mubr.f32.gmra.mrb[0].mxu0 %v668
        %v887 = vpop.f32.mrb[0].mxu0
        %v888 = vadd.f32 %v794, %v887
        %v889 = vpop.f32.mrb[0].mxu0
        %890 = vmatprep.mubr.f32.mxu0 0.0
        %891 = vmatmul.mubr.f32.gmra.mrb[0].mxu0 %v671
        %v892 = vpop.f32.mrb[0].mxu0
        %v893 = vadd.f32 %v794, %v892
        %v894 = vpop.f32.mrb[0].mxu0
        %895 = vmatprep.mubr.f32.mxu0 0.0
        %896 = vmatmul.mubr.f32.gmra.mrb[0].mxu0 %v674
        %v897 = vpop.f32.mrb[0].mxu0
        %v898 = vadd.f32 %v794, %v897
        %v899 = vpop.f32.mrb[0].mxu0
        %900 = vdwg.mxu0
        %901 = vst.msk [vmem:[%s455] sm:$0xff] %vm501, %v493
        %902 = vst.msk [vmem:[%s455 + $0x8] sm:$0xff] %vm501, %v494
        %903 = vst.msk [vmem:[%s455 + $0x10] sm:$0xff] %vm501, %v495
        %904 = vst.msk [vmem:[%s455 + $0x18] sm:$0xff] %vm501, %v496
        %905 = vst.msk [vmem:[%s455 + $0x20] sm:$0xff] %vm501, %v497
        %906 = vst.msk [vmem:[%s455 + $0x28] sm:$0xff] %vm501, %v498
        %907 = vst.msk [vmem:[%s455 + $0x30] sm:$0xff] %vm501, %v499
        %908 = vst.msk [vmem:[%s455 + $0x38] sm:$0xff] %vm501, %v500
        %909 = vst.msk [vmem:[%s462] sm:$0xff] %vm501, %v629
        %910 = vst.msk [vmem:[%s462 + $0x8] sm:$0xff] %vm501, %v630
        %911 = vst.msk [vmem:[%s462 + $0x10] sm:$0xff] %vm501, %v631
        %912 = vst.msk [vmem:[%s462 + $0x18] sm:$0xff] %vm501, %v632
        %913 = vst.msk [vmem:[%s462 + $0x20] sm:$0xff] %vm501, %v633
        %914 = vst.msk [vmem:[%s462 + $0x28] sm:$0xff] %vm501, %v634
        %915 = vst.msk [vmem:[%s462 + $0x30] sm:$0xff] %vm501, %v635
        %916 = vst.msk [vmem:[%s462 + $0x38] sm:$0xff] %vm501, %v636
        %917 = vst [vmem:[%s469] sm:$0xff] %v743
        %918 = vst [vmem:[%s469 + $0x8] sm:$0xff] %v748
        %919 = vst [vmem:[%s469 + $0x10] sm:$0xff] %v753
        %920 = vst [vmem:[%s469 + $0x18] sm:$0xff] %v758
        %921 = vst [vmem:[%s469 + $0x20] sm:$0xff] %v763
        %922 = vst [vmem:[%s469 + $0x28] sm:$0xff] %v768
        %923 = vst [vmem:[%s469 + $0x30] sm:$0xff] %v773
        %924 = vst [vmem:[%s469 + $0x38] sm:$0xff] %v778
        %925 = vst.msk [vmem:[%s476] sm:$0xff] %vm501, %v863
        %926 = vst.msk [vmem:[%s476 + $0x8] sm:$0xff] %vm501, %v868
        %927 = vst.msk [vmem:[%s476 + $0x10] sm:$0xff] %vm501, %v873
        %928 = vst.msk [vmem:[%s476 + $0x18] sm:$0xff] %vm501, %v878
        %929 = vst.msk [vmem:[%s476 + $0x20] sm:$0xff] %vm501, %v883
        %930 = vst.msk [vmem:[%s476 + $0x28] sm:$0xff] %vm501, %v888
        %931 = vst.msk [vmem:[%s476 + $0x30] sm:$0xff] %vm501, %v893
        %932 = vst.msk [vmem:[%s476 + $0x38] sm:$0xff] %vm501, %v898
        %s933 = sand.u32 %s218, 1
        %s934 = scalar_lea.sflag [#allocation4], %s933
        %s935 = sand.u32 %s218, 1
        %s936 = smul.addr %s935, 64
        %s937 = scalar_lea.vmem [#allocation10], %s936
        %s938 = sand.u32 %s37, 1
        %s939 = scalar_lea.sflag [#allocation12], %s938
        %s940 = sand.u32 %s244, 1
        %s941 = smul.addr %s940, 64
        %s942 = scalar_lea.vmem [#allocation11], %s941
        %s943 = sand.u32 %s37, 1
        %s944 = scalar_lea.sflag [#allocation12], %s943
        %s945 = sand.u32 %s270, 1
        %s946 = smul.addr %s945, 64
        %s947 = scalar_lea.vmem [#allocation13], %s946
        %s948 = sand.u32 %s296, 1
        %s949 = scalar_lea.sflag [#allocation15], %s948
        %s950 = sand.u32 %s296, 1
        %s951 = smul.addr %s950, 64
        %s952 = scalar_lea.vmem [#allocation14], %s951
        // Predicated region
        $region69: #{tpu_custom_call.1} parent=51 // pred_check
          %p953 = pneg %p228
        $region70: #{tpu_custom_call.1} parent=51 // pred_check_branch
          %955 = sbr.rel (%p953) target = $region72
        $region71: #{tpu_custom_call.1} parent=51 // pred_region
          %s957 = ssub.s32 1024, 1024
          %958 = vsyncadd %s934, %s957
          %s959 = smul.addr %s37, 8
          %s960 = smul.addr %s959, 128
          %s961 = scalar_lea.hbm %s8, %s960
          %s962 = sshll.u32 %s937, 4
          %s963 = int_to_ptr.vmem [resolvable:$true] %s962
          %968 = dma.vmem_to_hbm [thread:$0]  %s963, 1024, %s961, %s934, 128, 128, 8
        $region72: #{tpu_custom_call.1} parent=51 // pred_fallthru
          _
        // Predicated region
        $region73: #{tpu_custom_call.1} parent=51 // pred_check
          %p969 = pneg %p254
        $region74: #{tpu_custom_call.1} parent=51 // pred_check_branch
          %971 = sbr.rel (%p969) target = $region76
        $region75: #{tpu_custom_call.1} parent=51 // pred_region
          %s973 = ssub.s32 1024, 1024
          %974 = vsyncadd %s939, %s973
          %s975 = smul.addr %s37, 8
          %s976 = smul.addr %s975, 128
          %s977 = scalar_lea.hbm %s9, %s976
          %s978 = sshll.u32 %s942, 4
          %s979 = int_to_ptr.vmem [resolvable:$true] %s978
          %984 = dma.vmem_to_hbm [thread:$0]  %s979, 1024, %s977, %s939, 128, 128, 8
        $region76: #{tpu_custom_call.1} parent=51 // pred_fallthru
          _
        // Predicated region
        $region77: #{tpu_custom_call.1} parent=51 // pred_check
          %p985 = pneg %p280
        $region78: #{tpu_custom_call.1} parent=51 // pred_check_branch
          %987 = sbr.rel (%p985) target = $region80
        $region79: #{tpu_custom_call.1} parent=51 // pred_region
          %s989 = ssub.s32 1024, 1024
          %990 = vsyncadd %s944, %s989
          %s991 = smul.addr %s37, 8
          %s992 = smul.addr %s991, 128
          %s993 = scalar_lea.hbm %s10, %s992
          %s994 = sshll.u32 %s947, 4
          %s995 = int_to_ptr.vmem [resolvable:$true] %s994
          %1000 = dma.vmem_to_hbm [thread:$0]  %s995, 1024, %s993, %s944, 128, 128, 8
        $region80: #{tpu_custom_call.1} parent=51 // pred_fallthru
          _
        // Predicated region
        $region81: #{tpu_custom_call.1} parent=51 // pred_check
          %p1001 = pneg %p306
        $region82: #{tpu_custom_call.1} parent=51 // pred_check_branch
          %1003 = sbr.rel (%p1001) target = $region84
        $region83: #{tpu_custom_call.1} parent=51 // pred_region
          %s1005 = ssub.s32 1024, 1024
          %1006 = vsyncadd %s949, %s1005
          %s1007 = smul.addr %s37, 8
          %s1008 = smul.addr %s1007, 128
          %s1009 = scalar_lea.hbm %s11, %s1008
          %s1010 = sshll.u32 %s952, 4
          %s1011 = int_to_ptr.vmem [resolvable:$true] %s1010
          %1016 = dma.vmem_to_hbm [thread:$0]  %s1011, 1024, %s1009, %s949, 128, 128, 8
        $region84: #{tpu_custom_call.1} parent=51 // pred_fallthru
          _
      $region52: #{tpu_custom_call.1} parent=5 // pred_fallthru
        _
      %p1017 = scmp.le.s32.totalorder 2, %s32
      // Predicated region
      $region85: #{tpu_custom_call.1} parent=5 // pred_check
        %p1018 = pneg %p1017
      $region86: #{tpu_custom_call.1} parent=5 // pred_check_branch
        %1020 = sbr.rel (%p1018) target = $region88
      $region87: #{tpu_custom_call.1} parent=5 // pred_region
        %s1021 = ssub.s32 %s32, 2
        // Predicated region
        $region89: #{tpu_custom_call.1} parent=87 // pred_check
          %p1022 = pneg %p234
        $region90: #{tpu_custom_call.1} parent=87 // pred_check_branch
          %1024 = sbr.rel (%p1022) target = $region92
        $region91: #{tpu_custom_call.1} parent=87 // pred_region
          %s1025 = sand.u32 %s219, 1
          %s1026 = scalar_lea.sflag [#allocation4], %s1025
          %s1027 = sand.u32 %s219, 1
          %s1028 = smul.addr %s1027, 64
          %s1029 = scalar_lea.vmem [#allocation10], %s1028
          %1030 = dma.done %s1026, 1024
        $region92: #{tpu_custom_call.1} parent=87 // pred_fallthru
          _
        // Predicated region
        $region93: #{tpu_custom_call.1} parent=87 // pred_check
          %p1031 = pneg %p260
        $region94: #{tpu_custom_call.1} parent=87 // pred_check_branch
          %1033 = sbr.rel (%p1031) target = $region96
        $region95: #{tpu_custom_call.1} parent=87 // pred_region
          %s1034 = sand.u32 %s38, 1
          %s1035 = scalar_lea.sflag [#allocation12], %s1034
          %s1036 = sand.u32 %s245, 1
          %s1037 = smul.addr %s1036, 64
          %s1038 = scalar_lea.vmem [#allocation11], %s1037
          %1039 = dma.done %s1035, 1024
        $region96: #{tpu_custom_call.1} parent=87 // pred_fallthru
          _
        // Predicated region
        $region97: #{tpu_custom_call.1} parent=87 // pred_check
          %p1040 = pneg %p286
        $region98: #{tpu_custom_call.1} parent=87 // pred_check_branch
          %1042 = sbr.rel (%p1040) target = $region100
        $region99: #{tpu_custom_call.1} parent=87 // pred_region
          %s1043 = sand.u32 %s38, 1
          %s1044 = scalar_lea.sflag [#allocation12], %s1043
          %s1045 = sand.u32 %s271, 1
          %s1046 = smul.addr %s1045, 64
          %s1047 = scalar_lea.vmem [#allocation13], %s1046
          %1048 = dma.done %s1044, 1024
        $region100: #{tpu_custom_call.1} parent=87 // pred_fallthru
          _
        // Predicated region
        $region101: #{tpu_custom_call.1} parent=87 // pred_check
          %p1049 = pneg %p312
        $region102: #{tpu_custom_call.1} parent=87 // pred_check_branch
          %1051 = sbr.rel (%p1049) target = $region104
        $region103: #{tpu_custom_call.1} parent=87 // pred_region
          %s1052 = sand.u32 %s297, 1
          %s1053 = scalar_lea.sflag [#allocation15], %s1052
          %s1054 = sand.u32 %s297, 1
          %s1055 = smul.addr %s1054, 64
          %s1056 = scalar_lea.vmem [#allocation14], %s1055
          %1057 = dma.done %s1053, 1024
        $region104: #{tpu_custom_call.1} parent=87 // pred_fallthru
          _
      $region88: #{tpu_custom_call.1} parent=5 // pred_fallthru
        _
    $region6: #{tpu_custom_call.1} parent=1 // loop_footer
      %s36 = sadd.s32 1, %s32
    $region7: #{tpu_custom_call.1} parent=1 // loop_footer_branch
      %31 = sbr.rel target = $region3
    $region8: #{tpu_custom_call.1} parent=1 // loop_exit
      _
    %1058 = vsyncpa [#allocation3], 1
    %s1059 = scalar_lea.sflag [#allocation3], 1
    %1060 = vsyncpa %s1059, 1
    %1061 = vsyncpa [#allocation6], 1
    %1062 = vsyncpa [#allocation9], 1
    %1063 = vsyncpa [#allocation4], 1
    %s1064 = scalar_lea.sflag [#allocation4], 1
    %1065 = vsyncpa %s1064, 1
    %1066 = vsyncpa [#allocation12], 1
    %s1067 = scalar_lea.sflag [#allocation12], 1
    %1068 = vsyncpa %s1067, 1
    %1069 = vsyncpa [#allocation15], 1
    %s1070 = scalar_lea.sflag [#allocation15], 1
    %1071 = vsyncpa %s1070, 1

</llo_original>
